<compile_context>
chip_gen: v5e
topology: v5e:2x2
jax: 0.10.0
libtpu: 0.0.40
codegen_flags: <defaults>
</compile_context>

<pallas_src>
import jax
import jax.numpy as jnp
from jax.experimental import pallas as pl
from jax.experimental.pallas import tpu as pltpu


CONTEXT_SIZE = 2
EMBEDDING_DIM = 3
HIDDEN = 128
LANE = 128     # TPU lane width: vocab is padded up to a multiple of this
B_TILE = 128   # batch rows per grid step (MXU-height friendly on v5e/v6e/v7x)

test_sentence = (
    "When forty winters shall besiege thy brow,\nAnd dig deep trenches in thy "
    "beauty's field,\nThy youth's proud livery so gazed on now,\nWill be a "
    "totter'd weed of small worth held:\nThen being asked, where all thy beauty "
    "lies,\nWhere all the treasure of thy lusty days;\nTo say, within thine own "
    "deep sunken eyes,\nWere an all-eating shame, and thriftless praise.\nHow "
    "much more praise deserv'd thy beauty's use,\nIf thou couldst answer 'This "
    "fair child of mine\nShall sum my count, and make my old excuse,'\nProving "
    "his beauty by succession thine!\nThis were to be new made when thou art "
    "old,\nAnd see thy blood warm when thou feel'st it cold."
).split()

# deterministic vocab ordering (sorted, unlike nondeterministic `set` iteration)
vocab = sorted(set(test_sentence))
word_to_ix = {w: i for i, w in enumerate(vocab)}
VOCAB_SIZE = len(vocab)


def ngram_kernel(idx_ref, emb_ref, w1_ref, b1_ref, w2_ref, b2_ref, out_ref):
    """Fused embedding-gather -> linear1 -> relu -> linear2 -> log_softmax."""
    b_tile, n_ctx = idx_ref.shape          # (B_TILE, CONTEXT_SIZE)
    v_pad, e_dim = emb_ref.shape           # (128, 3)
    hidden = w1_ref.shape[1]               # 128

    idx = idx_ref[...]                                               # (B, C) int32
    lane_ids = jax.lax.broadcasted_iota(jnp.int32, (b_tile, v_pad), 1)

    h = b1_ref[...]                                                  # (1, H) -> broadcasts
    for c in range(n_ctx):
        # Project the embedding table through this context slice of W1 on the
        # VPU: proj[v, :] = sum_e emb[v, e] * W1[c*E + e, :]   (K=3 is far too
        # small for the MXU; 3 unrolled broadcast-FMAs instead).
        proj = emb_ref[:, 0:1] * w1_ref[c * e_dim: c * e_dim + 1, :]
        for e in range(1, e_dim):
            proj = proj + (emb_ref[:, e:e + 1]
                           * w1_ref[c * e_dim + e: c * e_dim + e + 1, :])
        # One-hot gather fused with linear1: (B, Vpad) @ (Vpad, H) on the MXU.
        onehot = (idx[:, c:c + 1] == lane_ids).astype(jnp.float32)
        h = h + jnp.dot(onehot, proj, preferred_element_type=jnp.float32)

    h = jnp.maximum(h, 0.0)                                          # ReLU
    logits = (jnp.dot(h, w2_ref[...], preferred_element_type=jnp.float32)
              + b2_ref[...])                                         # (B, Vpad)

    # numerically-stable log_softmax over the (padded, lane-dense) vocab axis;
    # padded columns carry bias -1e30 so they don't perturb the max / sum.
    m = jnp.max(logits, axis=-1, keepdims=True)
    lse = m + jnp.log(jnp.sum(jnp.exp(logits - m), axis=-1, keepdims=True))
    out_ref[...] = logits - lse


def ngram_forward(contexts, emb, w1, b1, w2, b2):
    """Batched forward: each row of `contexts` int32[(B, CONTEXT_SIZE)] is one
    NGramLanguageModeler.forward call. Returns (B, VOCAB_SIZE) log-probs."""
    B, C = contexts.shape
    V, E = emb.shape
    H = w1.shape[1]
    v_pad = pl.cdiv(V, LANE) * LANE
    b_pad = pl.cdiv(B, B_TILE) * B_TILE

    idx_p = jnp.zeros((b_pad, C), jnp.int32).at[:B].set(contexts.astype(jnp.int32))
    emb_p = jnp.zeros((v_pad, E), jnp.float32).at[:V].set(emb)
    w2_p = jnp.zeros((H, v_pad), jnp.float32).at[:, :V].set(w2)
    b2_p = jnp.full((1, v_pad), -1e30, jnp.float32).at[:, :V].set(b2)

    out = pl.pallas_call(
        ngram_kernel,
        out_shape=jax.ShapeDtypeStruct((b_pad, v_pad), jnp.float32),
        grid=(b_pad // B_TILE,),
        in_specs=[
            pl.BlockSpec((B_TILE, C), lambda i: (i, 0)),   # token ids (per batch tile)
            pl.BlockSpec((v_pad, E), lambda i: (0, 0)),    # embedding table (resident)
            pl.BlockSpec((C * E, H), lambda i: (0, 0)),    # W1 (resident)
            pl.BlockSpec((1, H), lambda i: (0, 0)),        # b1 (resident)
            pl.BlockSpec((H, v_pad), lambda i: (0, 0)),    # W2 (resident, vocab-padded)
            pl.BlockSpec((1, v_pad), lambda i: (0, 0)),    # b2 (resident, -1e30 padded)
        ],
        out_specs=pl.BlockSpec((B_TILE, v_pad), lambda i: (i, 0)),
        compiler_params=pltpu.CompilerParams(
            dimension_semantics=("parallel",)),  # v7x: split batch tiles across TCs
    )(idx_p, emb_p, w1, b1, w2_p, b2_p)

    return out[:B, :V]


def ngram_reference(contexts, emb, w1, b1, w2, b2):
    x = emb[contexts].reshape(contexts.shape[0], -1).astype(jnp.float32)
    h = jnp.maximum(
        jnp.dot(x, w1, precision=jax.lax.Precision.HIGHEST) + b1, 0.0)
    logits = jnp.dot(h, w2, precision=jax.lax.Precision.HIGHEST) + b2
    return jax.nn.log_softmax(logits, axis=-1)


def init_params(key):
    k_emb, k_w1, k_b1, k_w2, k_b2 = jax.random.split(key, 5)
    in1 = CONTEXT_SIZE * EMBEDDING_DIM
    # nn.Embedding: N(0, 1); nn.Linear: U(-1/sqrt(fan_in), 1/sqrt(fan_in)).
    # Linear weights stored as (in, out) = PyTorch weight transposed.
    emb = jax.random.normal(k_emb, (VOCAB_SIZE, EMBEDDING_DIM), jnp.float32)
    lim1 = 1.0 / jnp.sqrt(in1)
    w1 = jax.random.uniform(k_w1, (in1, HIDDEN), jnp.float32, -lim1, lim1)
    b1 = jax.random.uniform(k_b1, (1, HIDDEN), jnp.float32, -lim1, lim1)
    lim2 = 1.0 / jnp.sqrt(HIDDEN)
    w2 = jax.random.uniform(k_w2, (HIDDEN, VOCAB_SIZE), jnp.float32, -lim2, lim2)
    b2 = jax.random.uniform(k_b2, (1, VOCAB_SIZE), jnp.float32, -lim2, lim2)
    return emb, w1, b1, w2, b2


if __name__ == "__main__":
    key = jax.random.PRNGKey(0)
    emb, w1, b1, w2, b2 = init_params(key)

    # All n-gram contexts of the sonnet: the original module is called once per
    # context; here every context goes through a single batched kernel call.
    contexts_py = [
        [word_to_ix[test_sentence[i]], word_to_ix[test_sentence[i + 1]]]
        for i in range(len(test_sentence) - CONTEXT_SIZE)
    ]
    contexts = jnp.array(contexts_py, dtype=jnp.int32)

    log_probs = ngram_forward(contexts, emb, w1, b1, w2, b2)
    log_probs = jax.block_until_ready(log_probs)

    ref = ngram_reference(contexts, emb, w1, b1, w2, b2)
    assert log_probs.shape == (contexts.shape[0], VOCAB_SIZE)
    assert jnp.allclose(log_probs, ref, atol=1e-4, rtol=1e-4), (
        "Pallas kernel mismatch vs JAX reference")
    # sanity: padded-vocab handling — each row must still be a valid log-softmax
    assert jnp.allclose(jnp.exp(log_probs).sum(axis=-1), 1.0, atol=1e-4)
    print("KERNEL_OK")
</pallas_src>

<mosaic_0001>
module attributes {stable_mosaic.version = 11 : i64} {
  func.func @ngram_kernel(%arg0: i32, %arg1: memref<128x2xi32, #tpu.memory_space<vmem>>, %arg2: memref<128x3xf32, #tpu.memory_space<vmem>>, %arg3: memref<6x128xf32, #tpu.memory_space<vmem>>, %arg4: memref<1x128xf32, #tpu.memory_space<vmem>>, %arg5: memref<128x128xf32, #tpu.memory_space<vmem>>, %arg6: memref<1x128xf32, #tpu.memory_space<vmem>>, %arg7: memref<128x128xf32, #tpu.memory_space<vmem>>) attributes {dimension_semantics = [#tpu.dimension_semantics<parallel>], iteration_bounds = array<i64: 1>, scalar_prefetch = 0 : i64, scratch_operands = 0 : i64, tpu.core_type = #tpu.core_type<tc>, window_params = [{transform_indices = @transform_0, window_bounds = array<i64: 128, 2>}, {pipeline_mode = #tpu.pipeline_mode<synchronous>, transform_indices = @transform_1, window_bounds = array<i64: 128, 3>}, {pipeline_mode = #tpu.pipeline_mode<synchronous>, transform_indices = @transform_2, window_bounds = array<i64: 6, 128>}, {pipeline_mode = #tpu.pipeline_mode<synchronous>, transform_indices = @transform_3, window_bounds = array<i64: 1, 128>}, {pipeline_mode = #tpu.pipeline_mode<synchronous>, transform_indices = @transform_4, window_bounds = array<i64: 128, 128>}, {pipeline_mode = #tpu.pipeline_mode<synchronous>, transform_indices = @transform_5, window_bounds = array<i64: 1, 128>}, {transform_indices = @transform_6, window_bounds = array<i64: 128, 128>}]} {
    %c0 = arith.constant 0 : index
    %c0_0 = arith.constant 0 : index
    %0 = vector.load %arg1[%c0, %c0_0] : memref<128x2xi32, #tpu.memory_space<vmem>>, vector<128x2xi32>
    %1 = tpu.iota {dimensions = array<i32: 1>} : vector<128x128xi32>
    %c0_1 = arith.constant 0 : index
    %c0_2 = arith.constant 0 : index
    %2 = vector.load %arg4[%c0_1, %c0_2] : memref<1x128xf32, #tpu.memory_space<vmem>>, vector<1x128xf32>
    %c0_3 = arith.constant 0 : index
    %c0_4 = arith.constant 0 : index
    %3 = vector.load %arg2[%c0_3, %c0_4] : memref<128x3xf32, #tpu.memory_space<vmem>>, vector<128x1xf32>
    %c0_5 = arith.constant 0 : index
    %c0_6 = arith.constant 0 : index
    %4 = vector.load %arg3[%c0_5, %c0_6] : memref<6x128xf32, #tpu.memory_space<vmem>>, vector<1x128xf32>
    %5 = vector.broadcast %3 : vector<128x1xf32> to vector<128x128xf32>
    %6 = vector.broadcast %4 : vector<1x128xf32> to vector<128x128xf32>
    %7 = arith.mulf %5, %6 : vector<128x128xf32>
    %c0_7 = arith.constant 0 : index
    %c1 = arith.constant 1 : index
    %8 = vector.load %arg2[%c0_7, %c1] : memref<128x3xf32, #tpu.memory_space<vmem>>, vector<128x1xf32>
    %c1_8 = arith.constant 1 : index
    %c0_9 = arith.constant 0 : index
    %9 = vector.load %arg3[%c1_8, %c0_9] : memref<6x128xf32, #tpu.memory_space<vmem>>, vector<1x128xf32>
    %10 = vector.broadcast %8 : vector<128x1xf32> to vector<128x128xf32>
    %11 = vector.broadcast %9 : vector<1x128xf32> to vector<128x128xf32>
    %12 = arith.mulf %10, %11 : vector<128x128xf32>
    %13 = arith.addf %7, %12 : vector<128x128xf32>
    %c0_10 = arith.constant 0 : index
    %c2 = arith.constant 2 : index
    %14 = vector.load %arg2[%c0_10, %c2] : memref<128x3xf32, #tpu.memory_space<vmem>>, vector<128x1xf32>
    %c2_11 = arith.constant 2 : index
    %c0_12 = arith.constant 0 : index
    %15 = vector.load %arg3[%c2_11, %c0_12] : memref<6x128xf32, #tpu.memory_space<vmem>>, vector<1x128xf32>
    %16 = vector.broadcast %14 : vector<128x1xf32> to vector<128x128xf32>
    %17 = vector.broadcast %15 : vector<1x128xf32> to vector<128x128xf32>
    %18 = arith.mulf %16, %17 : vector<128x128xf32>
    %19 = arith.addf %13, %18 : vector<128x128xf32>
    %20 = vector.extract_strided_slice %0 {offsets = [0, 0], sizes = [128, 1], strides = [1, 1]} : vector<128x2xi32> to vector<128x1xi32>
    %21 = vector.broadcast %20 : vector<128x1xi32> to vector<128x128xi32>
    %22 = arith.cmpi eq, %21, %1 : vector<128x128xi32>
    %23 = arith.extui %22 : vector<128x128xi1> to vector<128x128xi32>
    %24 = arith.sitofp %23 : vector<128x128xi32> to vector<128x128xf32>
    %cst = arith.constant dense<0.000000e+00> : vector<128x128xf32>
    %25 = tpu.matmul %24, %19, %cst {dimension_numbers = #tpu.dot_dimension_numbers<[1], [0], [0], [1], [0, 0, 1, 1], [], []>} : vector<128x128xf32>, vector<128x128xf32>, vector<128x128xf32> -> vector<128x128xf32>
    %26 = vector.broadcast %2 : vector<1x128xf32> to vector<128x128xf32>
    %27 = arith.addf %26, %25 : vector<128x128xf32>
    %c0_13 = arith.constant 0 : index
    %c0_14 = arith.constant 0 : index
    %28 = vector.load %arg2[%c0_13, %c0_14] : memref<128x3xf32, #tpu.memory_space<vmem>>, vector<128x1xf32>
    %c3 = arith.constant 3 : index
    %c0_15 = arith.constant 0 : index
    %29 = vector.load %arg3[%c3, %c0_15] : memref<6x128xf32, #tpu.memory_space<vmem>>, vector<1x128xf32>
    %30 = vector.broadcast %28 : vector<128x1xf32> to vector<128x128xf32>
    %31 = vector.broadcast %29 : vector<1x128xf32> to vector<128x128xf32>
    %32 = arith.mulf %30, %31 : vector<128x128xf32>
    %c0_16 = arith.constant 0 : index
    %c1_17 = arith.constant 1 : index
    %33 = vector.load %arg2[%c0_16, %c1_17] : memref<128x3xf32, #tpu.memory_space<vmem>>, vector<128x1xf32>
    %c4 = arith.constant 4 : index
    %c0_18 = arith.constant 0 : index
    %34 = vector.load %arg3[%c4, %c0_18] : memref<6x128xf32, #tpu.memory_space<vmem>>, vector<1x128xf32>
    %35 = vector.broadcast %33 : vector<128x1xf32> to vector<128x128xf32>
    %36 = vector.broadcast %34 : vector<1x128xf32> to vector<128x128xf32>
    %37 = arith.mulf %35, %36 : vector<128x128xf32>
    %38 = arith.addf %32, %37 : vector<128x128xf32>
    %c0_19 = arith.constant 0 : index
    %c2_20 = arith.constant 2 : index
    %39 = vector.load %arg2[%c0_19, %c2_20] : memref<128x3xf32, #tpu.memory_space<vmem>>, vector<128x1xf32>
    %c5 = arith.constant 5 : index
    %c0_21 = arith.constant 0 : index
    %40 = vector.load %arg3[%c5, %c0_21] : memref<6x128xf32, #tpu.memory_space<vmem>>, vector<1x128xf32>
    %41 = vector.broadcast %39 : vector<128x1xf32> to vector<128x128xf32>
    %42 = vector.broadcast %40 : vector<1x128xf32> to vector<128x128xf32>
    %43 = arith.mulf %41, %42 : vector<128x128xf32>
    %44 = arith.addf %38, %43 : vector<128x128xf32>
    %45 = vector.extract_strided_slice %0 {offsets = [0, 1], sizes = [128, 1], strides = [1, 1]} : vector<128x2xi32> to vector<128x1xi32>
    %46 = vector.broadcast %45 : vector<128x1xi32> to vector<128x128xi32>
    %47 = arith.cmpi eq, %46, %1 : vector<128x128xi32>
    %48 = arith.extui %47 : vector<128x128xi1> to vector<128x128xi32>
    %49 = arith.sitofp %48 : vector<128x128xi32> to vector<128x128xf32>
    %cst_22 = arith.constant dense<0.000000e+00> : vector<128x128xf32>
    %50 = tpu.matmul %49, %44, %cst_22 {dimension_numbers = #tpu.dot_dimension_numbers<[1], [0], [0], [1], [0, 0, 1, 1], [], []>} : vector<128x128xf32>, vector<128x128xf32>, vector<128x128xf32> -> vector<128x128xf32>
    %51 = arith.addf %27, %50 : vector<128x128xf32>
    %cst_23 = arith.constant 0.000000e+00 : f32
    %52 = vector.broadcast %cst_23 : f32 to vector<128x128xf32>
    %53 = arith.maximumf %51, %52 : vector<128x128xf32>
    %c0_24 = arith.constant 0 : index
    %c0_25 = arith.constant 0 : index
    %54 = vector.load %arg5[%c0_24, %c0_25] : memref<128x128xf32, #tpu.memory_space<vmem>>, vector<128x128xf32>
    %cst_26 = arith.constant dense<0.000000e+00> : vector<128x128xf32>
    %55 = tpu.matmul %53, %54, %cst_26 {dimension_numbers = #tpu.dot_dimension_numbers<[1], [0], [0], [1], [0, 0, 1, 1], [], []>} : vector<128x128xf32>, vector<128x128xf32>, vector<128x128xf32> -> vector<128x128xf32>
    %c0_27 = arith.constant 0 : index
    %c0_28 = arith.constant 0 : index
    %56 = vector.load %arg6[%c0_27, %c0_28] : memref<1x128xf32, #tpu.memory_space<vmem>>, vector<1x128xf32>
    %57 = vector.broadcast %56 : vector<1x128xf32> to vector<128x128xf32>
    %58 = arith.addf %55, %57 : vector<128x128xf32>
    %cst_29 = arith.constant dense<0xFF800000> : vector<128xf32>
    %59 = vector.multi_reduction <maximumf>, %58, %cst_29 [1] : vector<128x128xf32> to vector<128xf32>
    %60 = vector.shape_cast %59 : vector<128xf32> to vector<128x1xf32>
    %61 = vector.broadcast %60 : vector<128x1xf32> to vector<128x128xf32>
    %62 = arith.subf %58, %61 : vector<128x128xf32>
    %63 = math.exp %62 : vector<128x128xf32>
    %cst_30 = arith.constant dense<0.000000e+00> : vector<128xf32>
    %64 = vector.multi_reduction <add>, %63, %cst_30 [1] : vector<128x128xf32> to vector<128xf32>
    %65 = vector.shape_cast %64 : vector<128xf32> to vector<128x1xf32>
    %66 = math.log %65 : vector<128x1xf32>
    %67 = arith.addf %60, %66 : vector<128x1xf32>
    %68 = vector.broadcast %67 : vector<128x1xf32> to vector<128x128xf32>
    %69 = arith.subf %58, %68 : vector<128x128xf32>
    %c0_31 = arith.constant 0 : index
    %c0_32 = arith.constant 0 : index
    %70 = vector.load %arg7[%c0_31, %c0_32] : memref<128x128xf32, #tpu.memory_space<vmem>>, vector<128x128xf32>
    tpu.vector_store %arg7[%c0_31, %c0_32], %69 {strides = array<i32>} : memref<128x128xf32, #tpu.memory_space<vmem>>, vector<128x128xf32>,
    return
  }
  func.func @transform_0(%arg0: i32) -> (i32, i32) {
    %c0_i32 = arith.constant 0 : i32
    %c0_i32_0 = arith.constant 0 : i32
    return %arg0, %c0_i32 : i32, i32
  }
  func.func @transform_1(%arg0: i32) -> (i32, i32) {
    %c0_i32 = arith.constant 0 : i32
    %c0_i32_0 = arith.constant 0 : i32
    %c0_i32_1 = arith.constant 0 : i32
    return %c0_i32, %c0_i32_0 : i32, i32
  }
  func.func @transform_2(%arg0: i32) -> (i32, i32) {
    %c0_i32 = arith.constant 0 : i32
    %c0_i32_0 = arith.constant 0 : i32
    %c0_i32_1 = arith.constant 0 : i32
    return %c0_i32, %c0_i32_0 : i32, i32
  }
  func.func @transform_3(%arg0: i32) -> (i32, i32) {
    %c0_i32 = arith.constant 0 : i32
    %c0_i32_0 = arith.constant 0 : i32
    %c0_i32_1 = arith.constant 0 : i32
    return %c0_i32, %c0_i32_0 : i32, i32
  }
  func.func @transform_4(%arg0: i32) -> (i32, i32) {
    %c0_i32 = arith.constant 0 : i32
    %c0_i32_0 = arith.constant 0 : i32
    %c0_i32_1 = arith.constant 0 : i32
    return %c0_i32, %c0_i32_0 : i32, i32
  }
  func.func @transform_5(%arg0: i32) -> (i32, i32) {
    %c0_i32 = arith.constant 0 : i32
    %c0_i32_0 = arith.constant 0 : i32
    %c0_i32_1 = arith.constant 0 : i32
    return %c0_i32, %c0_i32_0 : i32, i32
  }
  func.func @transform_6(%arg0: i32) -> (i32, i32) {
    %c0_i32 = arith.constant 0 : i32
    %c0_i32_0 = arith.constant 0 : i32
    return %arg0, %c0_i32 : i32, i32
  }
}

</mosaic_0001>

<llo_original>
// kernel: tpu_custom_call.1
$region0: #{tpu_custom_call.1}
  #allocation0 [shape = 'u32[]', space=smem, size = 0x4, offset = 0x4, fixed_abs, tag = 'smem constant byte address 0x4 - core index']
  #allocation1 [shape = 'u32[72,128]{1,0:T(1,128)}', space=vmem, size = 0x9000, scoped, tag = 'internal scratch']
  %s0 = inlined_call_operand.vmem [shape: s32[128,2], index: 0, kind: input, shape index: {}]
  %s1 = inlined_call_operand.vmem [shape: f32[128,3], index: 1, kind: input, shape index: {}]
  %s2 = inlined_call_operand.vmem [shape: f32[6,128], index: 2, kind: input, shape index: {}]
  %s3 = inlined_call_operand.vmem [shape: f32[1,128], index: 3, kind: input, shape index: {}]
  %s4 = inlined_call_operand.vmem [shape: f32[128,128], index: 4, kind: input, shape index: {}]
  %s5 = inlined_call_operand.vmem [shape: f32[1,128], index: 5, kind: input, shape index: {}]
  %s6 = inlined_call_operand.hbm [shape: f32[128,128], index: 6, kind: output, shape index: {}]
  %s7 = sld [smem:[#allocation0]]
  $region34: #{tpu_custom_call.1} parent=0
    _
  %s9 = ssub.s32 1, %s7
  %s10 = scalar_select 0, %s9, %s7
  $region1: #{tpu_custom_call.1} parent=0
    #allocation2 [shape = 'u8[65536]{0}', space=vmem, size = 0x10000, scoped, tag = 'output window, operand 0, single buffered']
    #allocation3 [shape = 's32[1]{0}', space=sflag, size = 0x4, scoped, tag = 'scoped memory for tpu_custom_call.1']
    %11 = vsyncpa [#allocation3], 0
    // Predicated region
    $region2: #{tpu_custom_call.1} parent=1 // pred_check
      _
    $region3: #{tpu_custom_call.1} parent=1 // pred_check_branch
      %13 = sbr.rel (0) target = $region5
    $region4: #{tpu_custom_call.1} parent=1 // pred_region
      _
    $region5: #{tpu_custom_call.1} parent=1 // pred_fallthru
      _
    // Predicated region
    $region6: #{tpu_custom_call.1} parent=1 // pred_check
      _
    $region7: #{tpu_custom_call.1} parent=1 // pred_check_branch
      %15 = sbr.rel (0) target = $region9
    $region8: #{tpu_custom_call.1} parent=1 // pred_region
      _
    $region9: #{tpu_custom_call.1} parent=1 // pred_fallthru
      _
    // Predicated region
    $region10: #{tpu_custom_call.1} parent=1 // pred_check
      _
    $region11: #{tpu_custom_call.1} parent=1 // pred_check_branch
      %17 = sbr.rel (0) target = $region13
    $region12: #{tpu_custom_call.1} parent=1 // pred_region
      _
    $region13: #{tpu_custom_call.1} parent=1 // pred_fallthru
      _
    // Predicated region
    $region14: #{tpu_custom_call.1} parent=1 // pred_check
      _
    $region15: #{tpu_custom_call.1} parent=1 // pred_check_branch
      %19 = sbr.rel (0) target = $region17
    $region16: #{tpu_custom_call.1} parent=1 // pred_region
      _
    $region17: #{tpu_custom_call.1} parent=1 // pred_fallthru
      _
    // Predicated region
    $region18: #{tpu_custom_call.1} parent=1 // pred_check
      _
    $region19: #{tpu_custom_call.1} parent=1 // pred_check_branch
      %21 = sbr.rel (0) target = $region21
    $region20: #{tpu_custom_call.1} parent=1 // pred_region
      _
    $region21: #{tpu_custom_call.1} parent=1 // pred_fallthru
      _
    // Predicated region
    $region22: #{tpu_custom_call.1} parent=1 // pred_check
      _
    $region23: #{tpu_custom_call.1} parent=1 // pred_check_branch
      %23 = sbr.rel (0) target = $region25
    $region24: #{tpu_custom_call.1} parent=1 // pred_region
      _
    $region25: #{tpu_custom_call.1} parent=1 // pred_fallthru
      _
    %v24 = vld [vmem:[%s0] sm:$0xff]
    %v25 = vld [vmem:[%s0 + $0x8] sm:$0xff]
    %v26 = vld [vmem:[%s0 + $0x10] sm:$0xff]
    %v27 = vld [vmem:[%s0 + $0x18] sm:$0xff]
    %v28 = vld [vmem:[%s0 + $0x20] sm:$0xff]
    %v29 = vld [vmem:[%s0 + $0x28] sm:$0xff]
    %v30 = vld [vmem:[%s0 + $0x30] sm:$0xff]
    %v31 = vld [vmem:[%s0 + $0x38] sm:$0xff]
    %v32 = vld [vmem:[%s0 + $0x40] sm:$0xff]
    %v33 = vld [vmem:[%s0 + $0x48] sm:$0xff]
    %v34 = vld [vmem:[%s0 + $0x50] sm:$0xff]
    %v35 = vld [vmem:[%s0 + $0x58] sm:$0xff]
    %v36 = vld [vmem:[%s0 + $0x60] sm:$0xff]
    %v37 = vld [vmem:[%s0 + $0x68] sm:$0xff]
    %v38 = vld [vmem:[%s0 + $0x70] sm:$0xff]
    %v39 = vld [vmem:[%s0 + $0x78] sm:$0xff]
    %v40 = vlaneseq
    %v41 = vand.u32 %v40, 127
    %v42 = vld [vmem:[%s3] sm:$0x1]
    %v43 = vld [vmem:[%s1] sm:$0xff]
    %v44 = vld [vmem:[%s1 + $0x8] sm:$0xff]
    %v45 = vld [vmem:[%s1 + $0x10] sm:$0xff]
    %v46 = vld [vmem:[%s1 + $0x18] sm:$0xff]
    %v47 = vld [vmem:[%s1 + $0x20] sm:$0xff]
    %v48 = vld [vmem:[%s1 + $0x28] sm:$0xff]
    %v49 = vld [vmem:[%s1 + $0x30] sm:$0xff]
    %v50 = vld [vmem:[%s1 + $0x38] sm:$0xff]
    %v51 = vld [vmem:[%s1 + $0x40] sm:$0xff]
    %v52 = vld [vmem:[%s1 + $0x48] sm:$0xff]
    %v53 = vld [vmem:[%s1 + $0x50] sm:$0xff]
    %v54 = vld [vmem:[%s1 + $0x58] sm:$0xff]
    %v55 = vld [vmem:[%s1 + $0x60] sm:$0xff]
    %v56 = vld [vmem:[%s1 + $0x68] sm:$0xff]
    %v57 = vld [vmem:[%s1 + $0x70] sm:$0xff]
    %v58 = vld [vmem:[%s1 + $0x78] sm:$0xff]
    %v59 = vld [vmem:[%s2] sm:$0x1]
    %61 = vset.pattern.permute.xlu0 0
    %62 = vperm.xlu0 %61, %v43
    %v63 = vpop.permute.xlu0 %62
    %66 = vset.pattern.permute.xlu0 0
    %67 = vperm.xlu0 %66, %v44
    %v68 = vpop.permute.xlu0 %67
    %71 = vset.pattern.permute.xlu0 0
    %72 = vperm.xlu0 %71, %v45
    %v73 = vpop.permute.xlu0 %72
    %76 = vset.pattern.permute.xlu0 0
    %77 = vperm.xlu0 %76, %v46
    %v78 = vpop.permute.xlu0 %77
    %81 = vset.pattern.permute.xlu0 0
    %82 = vperm.xlu0 %81, %v47
    %v83 = vpop.permute.xlu0 %82
    %86 = vset.pattern.permute.xlu0 0
    %87 = vperm.xlu0 %86, %v48
    %v88 = vpop.permute.xlu0 %87
    %91 = vset.pattern.permute.xlu0 0
    %92 = vperm.xlu0 %91, %v49
    %v93 = vpop.permute.xlu0 %92
    %96 = vset.pattern.permute.xlu0 0
    %97 = vperm.xlu0 %96, %v50
    %v98 = vpop.permute.xlu0 %97
    %101 = vset.pattern.permute.xlu0 0
    %102 = vperm.xlu0 %101, %v51
    %v103 = vpop.permute.xlu0 %102
    %106 = vset.pattern.permute.xlu0 0
    %107 = vperm.xlu0 %106, %v52
    %v108 = vpop.permute.xlu0 %107
    %111 = vset.pattern.permute.xlu0 0
    %112 = vperm.xlu0 %111, %v53
    %v113 = vpop.permute.xlu0 %112
    %116 = vset.pattern.permute.xlu0 0
    %117 = vperm.xlu0 %116, %v54
    %v118 = vpop.permute.xlu0 %117
    %121 = vset.pattern.permute.xlu0 0
    %122 = vperm.xlu0 %121, %v55
    %v123 = vpop.permute.xlu0 %122
    %126 = vset.pattern.permute.xlu0 0
    %127 = vperm.xlu0 %126, %v56
    %v128 = vpop.permute.xlu0 %127
    %131 = vset.pattern.permute.xlu0 0
    %132 = vperm.xlu0 %131, %v57
    %v133 = vpop.permute.xlu0 %132
    %136 = vset.pattern.permute.xlu0 0
    %137 = vperm.xlu0 %136, %v58
    %v138 = vpop.permute.xlu0 %137
    %v140 = vperm.slane %v59, 0
    %v141 = vmul.f32 %v63, %v140
    %v142 = vmul.f32 %v68, %v140
    %v143 = vmul.f32 %v73, %v140
    %v144 = vmul.f32 %v78, %v140
    %v145 = vmul.f32 %v83, %v140
    %v146 = vmul.f32 %v88, %v140
    %v147 = vmul.f32 %v93, %v140
    %v148 = vmul.f32 %v98, %v140
    %v149 = vmul.f32 %v103, %v140
    %v150 = vmul.f32 %v108, %v140
    %v151 = vmul.f32 %v113, %v140
    %v152 = vmul.f32 %v118, %v140
    %v153 = vmul.f32 %v123, %v140
    %v154 = vmul.f32 %v128, %v140
    %v155 = vmul.f32 %v133, %v140
    %v156 = vmul.f32 %v138, %v140
    %v157 = vld [vmem:[%s2 + $0x1] sm:$0x1]
    %158 = vset.pattern.permute.xlu0 1
    %159 = vperm.xlu0 %158, %v43
    %v160 = vpop.permute.xlu0 %159
    %162 = vset.pattern.permute.xlu0 1
    %163 = vperm.xlu0 %162, %v44
    %v164 = vpop.permute.xlu0 %163
    %166 = vset.pattern.permute.xlu0 1
    %167 = vperm.xlu0 %166, %v45
    %v168 = vpop.permute.xlu0 %167
    %170 = vset.pattern.permute.xlu0 1
    %171 = vperm.xlu0 %170, %v46
    %v172 = vpop.permute.xlu0 %171
    %174 = vset.pattern.permute.xlu0 1
    %175 = vperm.xlu0 %174, %v47
    %v176 = vpop.permute.xlu0 %175
    %178 = vset.pattern.permute.xlu0 1
    %179 = vperm.xlu0 %178, %v48
    %v180 = vpop.permute.xlu0 %179
    %182 = vset.pattern.permute.xlu0 1
    %183 = vperm.xlu0 %182, %v49
    %v184 = vpop.permute.xlu0 %183
    %186 = vset.pattern.permute.xlu0 1
    %187 = vperm.xlu0 %186, %v50
    %v188 = vpop.permute.xlu0 %187
    %190 = vset.pattern.permute.xlu0 1
    %191 = vperm.xlu0 %190, %v51
    %v192 = vpop.permute.xlu0 %191
    %194 = vset.pattern.permute.xlu0 1
    %195 = vperm.xlu0 %194, %v52
    %v196 = vpop.permute.xlu0 %195
    %198 = vset.pattern.permute.xlu0 1
    %199 = vperm.xlu0 %198, %v53
    %v200 = vpop.permute.xlu0 %199
    %202 = vset.pattern.permute.xlu0 1
    %203 = vperm.xlu0 %202, %v54
    %v204 = vpop.permute.xlu0 %203
    %206 = vset.pattern.permute.xlu0 1
    %207 = vperm.xlu0 %206, %v55
    %v208 = vpop.permute.xlu0 %207
    %210 = vset.pattern.permute.xlu0 1
    %211 = vperm.xlu0 %210, %v56
    %v212 = vpop.permute.xlu0 %211
    %214 = vset.pattern.permute.xlu0 1
    %215 = vperm.xlu0 %214, %v57
    %v216 = vpop.permute.xlu0 %215
    %218 = vset.pattern.permute.xlu0 1
    %219 = vperm.xlu0 %218, %v58
    %v220 = vpop.permute.xlu0 %219
    %v222 = vperm.slane %v157, 0
    %v223 = vmul.f32 %v160, %v222
    %v224 = vmul.f32 %v164, %v222
    %v225 = vmul.f32 %v168, %v222
    %v226 = vmul.f32 %v172, %v222
    %v227 = vmul.f32 %v176, %v222
    %v228 = vmul.f32 %v180, %v222
    %v229 = vmul.f32 %v184, %v222
    %v230 = vmul.f32 %v188, %v222
    %v231 = vmul.f32 %v192, %v222
    %v232 = vmul.f32 %v196, %v222
    %v233 = vmul.f32 %v200, %v222
    %v234 = vmul.f32 %v204, %v222
    %v235 = vmul.f32 %v208, %v222
    %v236 = vmul.f32 %v212, %v222
    %v237 = vmul.f32 %v216, %v222
    %v238 = vmul.f32 %v220, %v222
    %v239 = vadd.f32 %v141, %v223
    %v240 = vadd.f32 %v142, %v224
    %v241 = vadd.f32 %v143, %v225
    %v242 = vadd.f32 %v144, %v226
    %v243 = vadd.f32 %v145, %v227
    %v244 = vadd.f32 %v146, %v228
    %v245 = vadd.f32 %v147, %v229
    %v246 = vadd.f32 %v148, %v230
    %v247 = vadd.f32 %v149, %v231
    %v248 = vadd.f32 %v150, %v232
    %v249 = vadd.f32 %v151, %v233
    %v250 = vadd.f32 %v152, %v234
    %v251 = vadd.f32 %v153, %v235
    %v252 = vadd.f32 %v154, %v236
    %v253 = vadd.f32 %v155, %v237
    %v254 = vadd.f32 %v156, %v238
    %v255 = vld [vmem:[%s2 + $0x2] sm:$0x1]
    %256 = vset.pattern.permute.xlu0 2
    %257 = vperm.xlu0 %256, %v43
    %v258 = vpop.permute.xlu0 %257
    %260 = vset.pattern.permute.xlu0 2
    %261 = vperm.xlu0 %260, %v44
    %v262 = vpop.permute.xlu0 %261
    %264 = vset.pattern.permute.xlu0 2
    %265 = vperm.xlu0 %264, %v45
    %v266 = vpop.permute.xlu0 %265
    %268 = vset.pattern.permute.xlu0 2
    %269 = vperm.xlu0 %268, %v46
    %v270 = vpop.permute.xlu0 %269
    %272 = vset.pattern.permute.xlu0 2
    %273 = vperm.xlu0 %272, %v47
    %v274 = vpop.permute.xlu0 %273
    %276 = vset.pattern.permute.xlu0 2
    %277 = vperm.xlu0 %276, %v48
    %v278 = vpop.permute.xlu0 %277
    %280 = vset.pattern.permute.xlu0 2
    %281 = vperm.xlu0 %280, %v49
    %v282 = vpop.permute.xlu0 %281
    %284 = vset.pattern.permute.xlu0 2
    %285 = vperm.xlu0 %284, %v50
    %v286 = vpop.permute.xlu0 %285
    %288 = vset.pattern.permute.xlu0 2
    %289 = vperm.xlu0 %288, %v51
    %v290 = vpop.permute.xlu0 %289
    %292 = vset.pattern.permute.xlu0 2
    %293 = vperm.xlu0 %292, %v52
    %v294 = vpop.permute.xlu0 %293
    %296 = vset.pattern.permute.xlu0 2
    %297 = vperm.xlu0 %296, %v53
    %v298 = vpop.permute.xlu0 %297
    %300 = vset.pattern.permute.xlu0 2
    %301 = vperm.xlu0 %300, %v54
    %v302 = vpop.permute.xlu0 %301
    %304 = vset.pattern.permute.xlu0 2
    %305 = vperm.xlu0 %304, %v55
    %v306 = vpop.permute.xlu0 %305
    %308 = vset.pattern.permute.xlu0 2
    %309 = vperm.xlu0 %308, %v56
    %v310 = vpop.permute.xlu0 %309
    %312 = vset.pattern.permute.xlu0 2
    %313 = vperm.xlu0 %312, %v57
    %v314 = vpop.permute.xlu0 %313
    %316 = vset.pattern.permute.xlu0 2
    %317 = vperm.xlu0 %316, %v58
    %v318 = vpop.permute.xlu0 %317
    %v320 = vperm.slane %v255, 0
    %v321 = vmul.f32 %v258, %v320
    %v322 = vmul.f32 %v262, %v320
    %v323 = vmul.f32 %v266, %v320
    %v324 = vmul.f32 %v270, %v320
    %v325 = vmul.f32 %v274, %v320
    %v326 = vmul.f32 %v278, %v320
    %v327 = vmul.f32 %v282, %v320
    %v328 = vmul.f32 %v286, %v320
    %v329 = vmul.f32 %v290, %v320
    %v330 = vmul.f32 %v294, %v320
    %v331 = vmul.f32 %v298, %v320
    %v332 = vmul.f32 %v302, %v320
    %v333 = vmul.f32 %v306, %v320
    %v334 = vmul.f32 %v310, %v320
    %v335 = vmul.f32 %v314, %v320
    %v336 = vmul.f32 %v318, %v320
    %v337 = vadd.f32 %v239, %v321
    %v338 = vadd.f32 %v240, %v322
    %v339 = vadd.f32 %v241, %v323
    %v340 = vadd.f32 %v242, %v324
    %v341 = vadd.f32 %v243, %v325
    %v342 = vadd.f32 %v244, %v326
    %v343 = vadd.f32 %v245, %v327
    %v344 = vadd.f32 %v246, %v328
    %v345 = vadd.f32 %v247, %v329
    %v346 = vadd.f32 %v248, %v330
    %v347 = vadd.f32 %v249, %v331
    %v348 = vadd.f32 %v250, %v332
    %v349 = vadd.f32 %v251, %v333
    %v350 = vadd.f32 %v252, %v334
    %v351 = vadd.f32 %v253, %v335
    %v352 = vadd.f32 %v254, %v336
    %353 = vset.pattern.permute.xlu0 0
    %354 = vperm.xlu0 %353, %v24
    %v355 = vpop.permute.xlu0 %354
    %356 = vset.pattern.permute.xlu0 0
    %357 = vperm.xlu0 %356, %v25
    %v358 = vpop.permute.xlu0 %357
    %359 = vset.pattern.permute.xlu0 0
    %360 = vperm.xlu0 %359, %v26
    %v361 = vpop.permute.xlu0 %360
    %362 = vset.pattern.permute.xlu0 0
    %363 = vperm.xlu0 %362, %v27
    %v364 = vpop.permute.xlu0 %363
    %365 = vset.pattern.permute.xlu0 0
    %366 = vperm.xlu0 %365, %v28
    %v367 = vpop.permute.xlu0 %366
    %368 = vset.pattern.permute.xlu0 0
    %369 = vperm.xlu0 %368, %v29
    %v370 = vpop.permute.xlu0 %369
    %371 = vset.pattern.permute.xlu0 0
    %372 = vperm.xlu0 %371, %v30
    %v373 = vpop.permute.xlu0 %372
    %374 = vset.pattern.permute.xlu0 0
    %375 = vperm.xlu0 %374, %v31
    %v376 = vpop.permute.xlu0 %375
    %377 = vset.pattern.permute.xlu0 0
    %378 = vperm.xlu0 %377, %v32
    %v379 = vpop.permute.xlu0 %378
    %380 = vset.pattern.permute.xlu0 0
    %381 = vperm.xlu0 %380, %v33
    %v382 = vpop.permute.xlu0 %381
    %383 = vset.pattern.permute.xlu0 0
    %384 = vperm.xlu0 %383, %v34
    %v385 = vpop.permute.xlu0 %384
    %386 = vset.pattern.permute.xlu0 0
    %387 = vperm.xlu0 %386, %v35
    %v388 = vpop.permute.xlu0 %387
    %389 = vset.pattern.permute.xlu0 0
    %390 = vperm.xlu0 %389, %v36
    %v391 = vpop.permute.xlu0 %390
    %392 = vset.pattern.permute.xlu0 0
    %393 = vperm.xlu0 %392, %v37
    %v394 = vpop.permute.xlu0 %393
    %395 = vset.pattern.permute.xlu0 0
    %396 = vperm.xlu0 %395, %v38
    %v397 = vpop.permute.xlu0 %396
    %398 = vset.pattern.permute.xlu0 0
    %399 = vperm.xlu0 %398, %v39
    %v400 = vpop.permute.xlu0 %399
    %vm401 = vcmp.eq.s32.totalorder %v355, %v41
    %vm402 = vcmp.eq.s32.totalorder %v358, %v41
    %vm403 = vcmp.eq.s32.totalorder %v361, %v41
    %vm404 = vcmp.eq.s32.totalorder %v364, %v41
    %vm405 = vcmp.eq.s32.totalorder %v367, %v41
    %vm406 = vcmp.eq.s32.totalorder %v370, %v41
    %vm407 = vcmp.eq.s32.totalorder %v373, %v41
    %vm408 = vcmp.eq.s32.totalorder %v376, %v41
    %vm409 = vcmp.eq.s32.totalorder %v379, %v41
    %vm410 = vcmp.eq.s32.totalorder %v382, %v41
    %vm411 = vcmp.eq.s32.totalorder %v385, %v41
    %vm412 = vcmp.eq.s32.totalorder %v388, %v41
    %vm413 = vcmp.eq.s32.totalorder %v391, %v41
    %vm414 = vcmp.eq.s32.totalorder %v394, %v41
    %vm415 = vcmp.eq.s32.totalorder %v397, %v41
    %vm416 = vcmp.eq.s32.totalorder %v400, %v41
    %v417 = vsel %vm401, 1, 0
    %v418 = vsel %vm402, 1, 0
    %v419 = vsel %vm403, 1, 0
    %v420 = vsel %vm404, 1, 0
    %v421 = vsel %vm405, 1, 0
    %v422 = vsel %vm406, 1, 0
    %v423 = vsel %vm407, 1, 0
    %v424 = vsel %vm408, 1, 0
    %v425 = vsel %vm409, 1, 0
    %v426 = vsel %vm410, 1, 0
    %v427 = vsel %vm411, 1, 0
    %v428 = vsel %vm412, 1, 0
    %v429 = vsel %vm413, 1, 0
    %v430 = vsel %vm414, 1, 0
    %v431 = vsel %vm415, 1, 0
    %v432 = vsel %vm416, 1, 0
    %v433 = vcvt.s32.f32 %v417
    %v434 = vcvt.s32.f32 %v418
    %v435 = vcvt.s32.f32 %v419
    %v436 = vcvt.s32.f32 %v420
    %v437 = vcvt.s32.f32 %v421
    %v438 = vcvt.s32.f32 %v422
    %v439 = vcvt.s32.f32 %v423
    %v440 = vcvt.s32.f32 %v424
    %v441 = vcvt.s32.f32 %v425
    %v442 = vcvt.s32.f32 %v426
    %v443 = vcvt.s32.f32 %v427
    %v444 = vcvt.s32.f32 %v428
    %v445 = vcvt.s32.f32 %v429
    %v446 = vcvt.s32.f32 %v430
    %v447 = vcvt.s32.f32 %v431
    %v448 = vcvt.s32.f32 %v432
    %449 = vmatpush.msra.mxu0 %v352
    %450 = vmatpush.msra.mxu0 %v351
    %451 = vmatpush.msra.mxu0 %v350
    %452 = vmatpush.msra.mxu0 %v349
    %453 = vmatpush.msra.mxu0 %v348
    %454 = vmatpush.msra.mxu0 %v347
    %455 = vmatpush.msra.mxu0 %v346
    %456 = vmatpush.msra.mxu0 %v345
    %457 = vmatpush.msra.mxu0 %v344
    %458 = vmatpush.msra.mxu0 %v343
    %459 = vmatpush.msra.mxu0 %v342
    %460 = vmatpush.msra.mxu0 %v341
    %461 = vmatpush.msra.mxu0 %v340
    %462 = vmatpush.msra.mxu0 %v339
    %463 = vmatpush.msra.mxu0 %v338
    %464 = vmatpush.msra.mxu0 %v337
    %465 = vmatmul.f32.gmra.mxu0 %v433
    %v466 = vpop.f32.mrf.mxu0
    %v467 = vadd.f32 0.0, %v466
    %468 = vmatmul.f32.gmra.mxu0 %v434
    %v469 = vpop.f32.mrf.mxu0
    %v470 = vadd.f32 0.0, %v469
    %471 = vmatmul.f32.gmra.mxu0 %v435
    %v472 = vpop.f32.mrf.mxu0
    %v473 = vadd.f32 0.0, %v472
    %474 = vmatmul.f32.gmra.mxu0 %v436
    %v475 = vpop.f32.mrf.mxu0
    %v476 = vadd.f32 0.0, %v475
    %477 = vmatmul.f32.gmra.mxu0 %v437
    %v478 = vpop.f32.mrf.mxu0
    %v479 = vadd.f32 0.0, %v478
    %480 = vmatmul.f32.gmra.mxu0 %v438
    %v481 = vpop.f32.mrf.mxu0
    %v482 = vadd.f32 0.0, %v481
    %483 = vmatmul.f32.gmra.mxu0 %v439
    %v484 = vpop.f32.mrf.mxu0
    %v485 = vadd.f32 0.0, %v484
    %486 = vmatmul.f32.gmra.mxu0 %v440
    %v487 = vpop.f32.mrf.mxu0
    %v488 = vadd.f32 0.0, %v487
    %489 = vmatmul.f32.gmra.mxu0 %v441
    %v490 = vpop.f32.mrf.mxu0
    %v491 = vadd.f32 0.0, %v490
    %492 = vmatmul.f32.gmra.mxu0 %v442
    %v493 = vpop.f32.mrf.mxu0
    %v494 = vadd.f32 0.0, %v493
    %495 = vmatmul.f32.gmra.mxu0 %v443
    %v496 = vpop.f32.mrf.mxu0
    %v497 = vadd.f32 0.0, %v496
    %498 = vmatmul.f32.gmra.mxu0 %v444
    %v499 = vpop.f32.mrf.mxu0
    %v500 = vadd.f32 0.0, %v499
    %501 = vmatmul.f32.gmra.mxu0 %v445
    %v502 = vpop.f32.mrf.mxu0
    %v503 = vadd.f32 0.0, %v502
    %504 = vmatmul.f32.gmra.mxu0 %v446
    %v505 = vpop.f32.mrf.mxu0
    %v506 = vadd.f32 0.0, %v505
    %507 = vmatmul.f32.gmra.mxu0 %v447
    %v508 = vpop.f32.mrf.mxu0
    %v509 = vadd.f32 0.0, %v508
    %510 = vmatmul.f32.gmra.mxu0 %v448
    %v511 = vpop.f32.mrf.mxu0
    %v512 = vadd.f32 0.0, %v511
    %513 = vdwg.mxu0
    %v515 = vperm.slane %v42, 0
    %v517 = vadd.f32 %v515, %v467
    %v518 = vadd.f32 %v515, %v470
    %v519 = vadd.f32 %v515, %v473
    %v520 = vadd.f32 %v515, %v476
    %v521 = vadd.f32 %v515, %v479
    %v522 = vadd.f32 %v515, %v482
    %v523 = vadd.f32 %v515, %v485
    %v524 = vadd.f32 %v515, %v488
    %v525 = vadd.f32 %v515, %v491
    %v526 = vadd.f32 %v515, %v494
    %v527 = vadd.f32 %v515, %v497
    %v528 = vadd.f32 %v515, %v500
    %v529 = vadd.f32 %v515, %v503
    %v530 = vadd.f32 %v515, %v506
    %v531 = vadd.f32 %v515, %v509
    %v532 = vadd.f32 %v515, %v512
    %v533 = vld [vmem:[%s2 + $0x3] sm:$0x1]
    %v534 = vperm.slane %v533, 0
    %v535 = vmul.f32 %v63, %v534
    %v536 = vmul.f32 %v68, %v534
    %v537 = vmul.f32 %v73, %v534
    %v538 = vmul.f32 %v78, %v534
    %v539 = vmul.f32 %v83, %v534
    %v540 = vmul.f32 %v88, %v534
    %v541 = vmul.f32 %v93, %v534
    %v542 = vmul.f32 %v98, %v534
    %v543 = vmul.f32 %v103, %v534
    %v544 = vmul.f32 %v108, %v534
    %v545 = vmul.f32 %v113, %v534
    %v546 = vmul.f32 %v118, %v534
    %v547 = vmul.f32 %v123, %v534
    %v548 = vmul.f32 %v128, %v534
    %v549 = vmul.f32 %v133, %v534
    %v550 = vmul.f32 %v138, %v534
    %v551 = vld [vmem:[%s2 + $0x4] sm:$0x1]
    %v552 = vperm.slane %v551, 0
    %v553 = vmul.f32 %v160, %v552
    %v554 = vmul.f32 %v164, %v552
    %v555 = vmul.f32 %v168, %v552
    %v556 = vmul.f32 %v172, %v552
    %v557 = vmul.f32 %v176, %v552
    %v558 = vmul.f32 %v180, %v552
    %v559 = vmul.f32 %v184, %v552
    %v560 = vmul.f32 %v188, %v552
    %v561 = vmul.f32 %v192, %v552
    %v562 = vmul.f32 %v196, %v552
    %v563 = vmul.f32 %v200, %v552
    %v564 = vmul.f32 %v204, %v552
    %v565 = vmul.f32 %v208, %v552
    %v566 = vmul.f32 %v212, %v552
    %v567 = vmul.f32 %v216, %v552
    %v568 = vmul.f32 %v220, %v552
    %v569 = vadd.f32 %v535, %v553
    %v570 = vadd.f32 %v536, %v554
    %v571 = vadd.f32 %v537, %v555
    %v572 = vadd.f32 %v538, %v556
    %v573 = vadd.f32 %v539, %v557
    %v574 = vadd.f32 %v540, %v558
    %v575 = vadd.f32 %v541, %v559
    %v576 = vadd.f32 %v542, %v560
    %v577 = vadd.f32 %v543, %v561
    %v578 = vadd.f32 %v544, %v562
    %v579 = vadd.f32 %v545, %v563
    %v580 = vadd.f32 %v546, %v564
    %v581 = vadd.f32 %v547, %v565
    %v582 = vadd.f32 %v548, %v566
    %v583 = vadd.f32 %v549, %v567
    %v584 = vadd.f32 %v550, %v568
    %v585 = vld [vmem:[%s2 + $0x5] sm:$0x1]
    %v586 = vperm.slane %v585, 0
    %v587 = vmul.f32 %v258, %v586
    %v588 = vmul.f32 %v262, %v586
    %v589 = vmul.f32 %v266, %v586
    %v590 = vmul.f32 %v270, %v586
    %v591 = vmul.f32 %v274, %v586
    %v592 = vmul.f32 %v278, %v586
    %v593 = vmul.f32 %v282, %v586
    %v594 = vmul.f32 %v286, %v586
    %v595 = vmul.f32 %v290, %v586
    %v596 = vmul.f32 %v294, %v586
    %v597 = vmul.f32 %v298, %v586
    %v598 = vmul.f32 %v302, %v586
    %v599 = vmul.f32 %v306, %v586
    %v600 = vmul.f32 %v310, %v586
    %v601 = vmul.f32 %v314, %v586
    %v602 = vmul.f32 %v318, %v586
    %v603 = vadd.f32 %v569, %v587
    %v604 = vadd.f32 %v570, %v588
    %v605 = vadd.f32 %v571, %v589
    %v606 = vadd.f32 %v572, %v590
    %v607 = vadd.f32 %v573, %v591
    %v608 = vadd.f32 %v574, %v592
    %v609 = vadd.f32 %v575, %v593
    %v610 = vadd.f32 %v576, %v594
    %v611 = vadd.f32 %v577, %v595
    %v612 = vadd.f32 %v578, %v596
    %v613 = vadd.f32 %v579, %v597
    %v614 = vadd.f32 %v580, %v598
    %v615 = vadd.f32 %v581, %v599
    %v616 = vadd.f32 %v582, %v600
    %v617 = vadd.f32 %v583, %v601
    %v618 = vadd.f32 %v584, %v602
    %619 = vset.pattern.permute.xlu0 1
    %620 = vperm.xlu0 %619, %v24
    %v621 = vpop.permute.xlu0 %620
    %622 = vset.pattern.permute.xlu0 1
    %623 = vperm.xlu0 %622, %v25
    %v624 = vpop.permute.xlu0 %623
    %625 = vset.pattern.permute.xlu0 1
    %626 = vperm.xlu0 %625, %v26
    %v627 = vpop.permute.xlu0 %626
    %628 = vset.pattern.permute.xlu0 1
    %629 = vperm.xlu0 %628, %v27
    %v630 = vpop.permute.xlu0 %629
    %631 = vset.pattern.permute.xlu0 1
    %632 = vperm.xlu0 %631, %v28
    %v633 = vpop.permute.xlu0 %632
    %634 = vset.pattern.permute.xlu0 1
    %635 = vperm.xlu0 %634, %v29
    %v636 = vpop.permute.xlu0 %635
    %637 = vset.pattern.permute.xlu0 1
    %638 = vperm.xlu0 %637, %v30
    %v639 = vpop.permute.xlu0 %638
    %640 = vset.pattern.permute.xlu0 1
    %641 = vperm.xlu0 %640, %v31
    %v642 = vpop.permute.xlu0 %641
    %643 = vset.pattern.permute.xlu0 1
    %644 = vperm.xlu0 %643, %v32
    %v645 = vpop.permute.xlu0 %644
    %646 = vset.pattern.permute.xlu0 1
    %647 = vperm.xlu0 %646, %v33
    %v648 = vpop.permute.xlu0 %647
    %649 = vset.pattern.permute.xlu0 1
    %650 = vperm.xlu0 %649, %v34
    %v651 = vpop.permute.xlu0 %650
    %652 = vset.pattern.permute.xlu0 1
    %653 = vperm.xlu0 %652, %v35
    %v654 = vpop.permute.xlu0 %653
    %655 = vset.pattern.permute.xlu0 1
    %656 = vperm.xlu0 %655, %v36
    %v657 = vpop.permute.xlu0 %656
    %658 = vset.pattern.permute.xlu0 1
    %659 = vperm.xlu0 %658, %v37
    %v660 = vpop.permute.xlu0 %659
    %661 = vset.pattern.permute.xlu0 1
    %662 = vperm.xlu0 %661, %v38
    %v663 = vpop.permute.xlu0 %662
    %664 = vset.pattern.permute.xlu0 1
    %665 = vperm.xlu0 %664, %v39
    %v666 = vpop.permute.xlu0 %665
    %vm667 = vcmp.eq.s32.totalorder %v621, %v41
    %vm668 = vcmp.eq.s32.totalorder %v624, %v41
    %vm669 = vcmp.eq.s32.totalorder %v627, %v41
    %vm670 = vcmp.eq.s32.totalorder %v630, %v41
    %vm671 = vcmp.eq.s32.totalorder %v633, %v41
    %vm672 = vcmp.eq.s32.totalorder %v636, %v41
    %vm673 = vcmp.eq.s32.totalorder %v639, %v41
    %vm674 = vcmp.eq.s32.totalorder %v642, %v41
    %vm675 = vcmp.eq.s32.totalorder %v645, %v41
    %vm676 = vcmp.eq.s32.totalorder %v648, %v41
    %vm677 = vcmp.eq.s32.totalorder %v651, %v41
    %vm678 = vcmp.eq.s32.totalorder %v654, %v41
    %vm679 = vcmp.eq.s32.totalorder %v657, %v41
    %vm680 = vcmp.eq.s32.totalorder %v660, %v41
    %vm681 = vcmp.eq.s32.totalorder %v663, %v41
    %vm682 = vcmp.eq.s32.totalorder %v666, %v41
    %v683 = vsel %vm667, 1, 0
    %v684 = vsel %vm668, 1, 0
    %v685 = vsel %vm669, 1, 0
    %v686 = vsel %vm670, 1, 0
    %v687 = vsel %vm671, 1, 0
    %v688 = vsel %vm672, 1, 0
    %v689 = vsel %vm673, 1, 0
    %v690 = vsel %vm674, 1, 0
    %v691 = vsel %vm675, 1, 0
    %v692 = vsel %vm676, 1, 0
    %v693 = vsel %vm677, 1, 0
    %v694 = vsel %vm678, 1, 0
    %v695 = vsel %vm679, 1, 0
    %v696 = vsel %vm680, 1, 0
    %v697 = vsel %vm681, 1, 0
    %v698 = vsel %vm682, 1, 0
    %v699 = vcvt.s32.f32 %v683
    %v700 = vcvt.s32.f32 %v684
    %v701 = vcvt.s32.f32 %v685
    %v702 = vcvt.s32.f32 %v686
    %v703 = vcvt.s32.f32 %v687
    %v704 = vcvt.s32.f32 %v688
    %v705 = vcvt.s32.f32 %v689
    %v706 = vcvt.s32.f32 %v690
    %v707 = vcvt.s32.f32 %v691
    %v708 = vcvt.s32.f32 %v692
    %v709 = vcvt.s32.f32 %v693
    %v710 = vcvt.s32.f32 %v694
    %v711 = vcvt.s32.f32 %v695
    %v712 = vcvt.s32.f32 %v696
    %v713 = vcvt.s32.f32 %v697
    %v714 = vcvt.s32.f32 %v698
    %715 = vmatpush.msra.mxu0 %v618
    %716 = vmatpush.msra.mxu0 %v617
    %717 = vmatpush.msra.mxu0 %v616
    %718 = vmatpush.msra.mxu0 %v615
    %719 = vmatpush.msra.mxu0 %v614
    %720 = vmatpush.msra.mxu0 %v613
    %721 = vmatpush.msra.mxu0 %v612
    %722 = vmatpush.msra.mxu0 %v611
    %723 = vmatpush.msra.mxu0 %v610
    %724 = vmatpush.msra.mxu0 %v609
    %725 = vmatpush.msra.mxu0 %v608
    %726 = vmatpush.msra.mxu0 %v607
    %727 = vmatpush.msra.mxu0 %v606
    %728 = vmatpush.msra.mxu0 %v605
    %729 = vmatpush.msra.mxu0 %v604
    %730 = vmatpush.msra.mxu0 %v603
    %731 = vmatmul.f32.gmra.mxu0 %v699
    %v732 = vpop.f32.mrf.mxu0
    %v733 = vadd.f32 0.0, %v732
    %734 = vmatmul.f32.gmra.mxu0 %v700
    %v735 = vpop.f32.mrf.mxu0
    %v736 = vadd.f32 0.0, %v735
    %737 = vmatmul.f32.gmra.mxu0 %v701
    %v738 = vpop.f32.mrf.mxu0
    %v739 = vadd.f32 0.0, %v738
    %740 = vmatmul.f32.gmra.mxu0 %v702
    %v741 = vpop.f32.mrf.mxu0
    %v742 = vadd.f32 0.0, %v741
    %743 = vmatmul.f32.gmra.mxu0 %v703
    %v744 = vpop.f32.mrf.mxu0
    %v745 = vadd.f32 0.0, %v744
    %746 = vmatmul.f32.gmra.mxu0 %v704
    %v747 = vpop.f32.mrf.mxu0
    %v748 = vadd.f32 0.0, %v747
    %749 = vmatmul.f32.gmra.mxu0 %v705
    %v750 = vpop.f32.mrf.mxu0
    %v751 = vadd.f32 0.0, %v750
    %752 = vmatmul.f32.gmra.mxu0 %v706
    %v753 = vpop.f32.mrf.mxu0
    %v754 = vadd.f32 0.0, %v753
    %755 = vmatmul.f32.gmra.mxu0 %v707
    %v756 = vpop.f32.mrf.mxu0
    %v757 = vadd.f32 0.0, %v756
    %758 = vmatmul.f32.gmra.mxu0 %v708
    %v759 = vpop.f32.mrf.mxu0
    %v760 = vadd.f32 0.0, %v759
    %761 = vmatmul.f32.gmra.mxu0 %v709
    %v762 = vpop.f32.mrf.mxu0
    %v763 = vadd.f32 0.0, %v762
    %764 = vmatmul.f32.gmra.mxu0 %v710
    %v765 = vpop.f32.mrf.mxu0
    %v766 = vadd.f32 0.0, %v765
    %767 = vmatmul.f32.gmra.mxu0 %v711
    %v768 = vpop.f32.mrf.mxu0
    %v769 = vadd.f32 0.0, %v768
    %770 = vmatmul.f32.gmra.mxu0 %v712
    %v771 = vpop.f32.mrf.mxu0
    %v772 = vadd.f32 0.0, %v771
    %773 = vmatmul.f32.gmra.mxu0 %v713
    %v774 = vpop.f32.mrf.mxu0
    %v775 = vadd.f32 0.0, %v774
    %776 = vmatmul.f32.gmra.mxu0 %v714
    %v777 = vpop.f32.mrf.mxu0
    %v778 = vadd.f32 0.0, %v777
    %779 = vdwg.mxu0
    %v780 = vadd.f32 %v517, %v733
    %v781 = vadd.f32 %v518, %v736
    %v782 = vadd.f32 %v519, %v739
    %v783 = vadd.f32 %v520, %v742
    %v784 = vadd.f32 %v521, %v745
    %v785 = vadd.f32 %v522, %v748
    %v786 = vadd.f32 %v523, %v751
    %v787 = vadd.f32 %v524, %v754
    %v788 = vadd.f32 %v525, %v757
    %v789 = vadd.f32 %v526, %v760
    %v790 = vadd.f32 %v527, %v763
    %v791 = vadd.f32 %v528, %v766
    %v792 = vadd.f32 %v529, %v769
    %v793 = vadd.f32 %v530, %v772
    %v794 = vadd.f32 %v531, %v775
    %v795 = vadd.f32 %v532, %v778
    %v796 = vmax.f32 %v780, 0.0
    %v797 = vmax.f32 %v781, 0.0
    %v798 = vmax.f32 %v782, 0.0
    %v799 = vmax.f32 %v783, 0.0
    %v800 = vmax.f32 %v784, 0.0
    %v801 = vmax.f32 %v785, 0.0
    %v802 = vmax.f32 %v786, 0.0
    %v803 = vmax.f32 %v787, 0.0
    %v804 = vmax.f32 %v788, 0.0
    %v805 = vmax.f32 %v789, 0.0
    %v806 = vmax.f32 %v790, 0.0
    %v807 = vmax.f32 %v791, 0.0
    %v808 = vmax.f32 %v792, 0.0
    %v809 = vmax.f32 %v793, 0.0
    %v810 = vmax.f32 %v794, 0.0
    %v811 = vmax.f32 %v795, 0.0
    %v812 = vld [vmem:[%s4] sm:$0xff]
    %v813 = vld [vmem:[%s4 + $0x8] sm:$0xff]
    %v814 = vld [vmem:[%s4 + $0x10] sm:$0xff]
    %v815 = vld [vmem:[%s4 + $0x18] sm:$0xff]
    %v816 = vld [vmem:[%s4 + $0x20] sm:$0xff]
    %v817 = vld [vmem:[%s4 + $0x28] sm:$0xff]
    %v818 = vld [vmem:[%s4 + $0x30] sm:$0xff]
    %v819 = vld [vmem:[%s4 + $0x38] sm:$0xff]
    %v820 = vld [vmem:[%s4 + $0x40] sm:$0xff]
    %v821 = vld [vmem:[%s4 + $0x48] sm:$0xff]
    %v822 = vld [vmem:[%s4 + $0x50] sm:$0xff]
    %v823 = vld [vmem:[%s4 + $0x58] sm:$0xff]
    %v824 = vld [vmem:[%s4 + $0x60] sm:$0xff]
    %v825 = vld [vmem:[%s4 + $0x68] sm:$0xff]
    %v826 = vld [vmem:[%s4 + $0x70] sm:$0xff]
    %v827 = vld [vmem:[%s4 + $0x78] sm:$0xff]
    %v828 = vld [vmem:[%s5] sm:$0x1]
    %v830 = vperm.slane %v828, 0
    %832 = vmatpush.msra.mxu0 %v827
    %833 = vmatpush.msra.mxu0 %v826
    %834 = vmatpush.msra.mxu0 %v825
    %835 = vmatpush.msra.mxu0 %v824
    %836 = vmatpush.msra.mxu0 %v823
    %837 = vmatpush.msra.mxu0 %v822
    %838 = vmatpush.msra.mxu0 %v821
    %839 = vmatpush.msra.mxu0 %v820
    %840 = vmatpush.msra.mxu0 %v819
    %841 = vmatpush.msra.mxu0 %v818
    %842 = vmatpush.msra.mxu0 %v817
    %843 = vmatpush.msra.mxu0 %v816
    %844 = vmatpush.msra.mxu0 %v815
    %845 = vmatpush.msra.mxu0 %v814
    %846 = vmatpush.msra.mxu0 %v813
    %847 = vmatpush.msra.mxu0 %v812
    %848 = vmatmul.f32.gmra.mxu0 %v796
    %v849 = vpop.f32.mrf.mxu0
    %v850 = vadd.f32 %v830, %v849
    %851 = vmatmul.f32.gmra.mxu0 %v797
    %v852 = vpop.f32.mrf.mxu0
    %v853 = vadd.f32 %v830, %v852
    %854 = vmatmul.f32.gmra.mxu0 %v798
    %v855 = vpop.f32.mrf.mxu0
    %v856 = vadd.f32 %v830, %v855
    %857 = vmatmul.f32.gmra.mxu0 %v799
    %v858 = vpop.f32.mrf.mxu0
    %v859 = vadd.f32 %v830, %v858
    %860 = vmatmul.f32.gmra.mxu0 %v800
    %v861 = vpop.f32.mrf.mxu0
    %v862 = vadd.f32 %v830, %v861
    %863 = vmatmul.f32.gmra.mxu0 %v801
    %v864 = vpop.f32.mrf.mxu0
    %v865 = vadd.f32 %v830, %v864
    %866 = vmatmul.f32.gmra.mxu0 %v802
    %v867 = vpop.f32.mrf.mxu0
    %v868 = vadd.f32 %v830, %v867
    %869 = vmatmul.f32.gmra.mxu0 %v803
    %v870 = vpop.f32.mrf.mxu0
    %v871 = vadd.f32 %v830, %v870
    %872 = vmatmul.f32.gmra.mxu0 %v804
    %v873 = vpop.f32.mrf.mxu0
    %v874 = vadd.f32 %v830, %v873
    %875 = vmatmul.f32.gmra.mxu0 %v805
    %v876 = vpop.f32.mrf.mxu0
    %v877 = vadd.f32 %v830, %v876
    %878 = vmatmul.f32.gmra.mxu0 %v806
    %v879 = vpop.f32.mrf.mxu0
    %v880 = vadd.f32 %v830, %v879
    %881 = vmatmul.f32.gmra.mxu0 %v807
    %v882 = vpop.f32.mrf.mxu0
    %v883 = vadd.f32 %v830, %v882
    %884 = vmatmul.f32.gmra.mxu0 %v808
    %v885 = vpop.f32.mrf.mxu0
    %v886 = vadd.f32 %v830, %v885
    %887 = vmatmul.f32.gmra.mxu0 %v809
    %v888 = vpop.f32.mrf.mxu0
    %v889 = vadd.f32 %v830, %v888
    %890 = vmatmul.f32.gmra.mxu0 %v810
    %v891 = vpop.f32.mrf.mxu0
    %v892 = vadd.f32 %v830, %v891
    %893 = vmatmul.f32.gmra.mxu0 %v811
    %v894 = vpop.f32.mrf.mxu0
    %v895 = vadd.f32 %v830, %v894
    %896 = vdwg.mxu0
    %897 = vmax.xlane.f32.xlu0 %v850
    %v898 = vpop.xlane.xlu0 %897
    %899 = vmax.xlane.f32.xlu0 %v853
    %v900 = vpop.xlane.xlu0 %899
    %901 = vmax.xlane.f32.xlu0 %v856
    %v902 = vpop.xlane.xlu0 %901
    %903 = vmax.xlane.f32.xlu0 %v859
    %v904 = vpop.xlane.xlu0 %903
    %905 = vmax.xlane.f32.xlu0 %v862
    %v906 = vpop.xlane.xlu0 %905
    %907 = vmax.xlane.f32.xlu0 %v865
    %v908 = vpop.xlane.xlu0 %907
    %909 = vmax.xlane.f32.xlu0 %v868
    %v910 = vpop.xlane.xlu0 %909
    %911 = vmax.xlane.f32.xlu0 %v871
    %v912 = vpop.xlane.xlu0 %911
    %913 = vmax.xlane.f32.xlu0 %v874
    %v914 = vpop.xlane.xlu0 %913
    %915 = vmax.xlane.f32.xlu0 %v877
    %v916 = vpop.xlane.xlu0 %915
    %917 = vmax.xlane.f32.xlu0 %v880
    %v918 = vpop.xlane.xlu0 %917
    %919 = vmax.xlane.f32.xlu0 %v883
    %v920 = vpop.xlane.xlu0 %919
    %921 = vmax.xlane.f32.xlu0 %v886
    %v922 = vpop.xlane.xlu0 %921
    %923 = vmax.xlane.f32.xlu0 %v889
    %v924 = vpop.xlane.xlu0 %923
    %925 = vmax.xlane.f32.xlu0 %v892
    %v926 = vpop.xlane.xlu0 %925
    %927 = vmax.xlane.f32.xlu0 %v895
    %v928 = vpop.xlane.xlu0 %927
    %v929 = vsub.f32 %v850, %v898
    %v930 = vsub.f32 %v853, %v900
    %v931 = vsub.f32 %v856, %v902
    %v932 = vsub.f32 %v859, %v904
    %v933 = vsub.f32 %v862, %v906
    %v934 = vsub.f32 %v865, %v908
    %v935 = vsub.f32 %v868, %v910
    %v936 = vsub.f32 %v871, %v912
    %v937 = vsub.f32 %v874, %v914
    %v938 = vsub.f32 %v877, %v916
    %v939 = vsub.f32 %v880, %v918
    %v940 = vsub.f32 %v883, %v920
    %v941 = vsub.f32 %v886, %v922
    %v942 = vsub.f32 %v889, %v924
    %v943 = vsub.f32 %v892, %v926
    %v944 = vsub.f32 %v895, %v928
    %v945 = vmul.f32 %v929, 1.442695
    %v946 = vpow.pop %v945
    %v947 = vmul.f32 %v930, 1.442695
    %v948 = vpow.pop %v947
    %v949 = vmul.f32 %v931, 1.442695
    %v950 = vpow.pop %v949
    %v951 = vmul.f32 %v932, 1.442695
    %v952 = vpow.pop %v951
    %v953 = vmul.f32 %v933, 1.442695
    %v954 = vpow.pop %v953
    %v955 = vmul.f32 %v934, 1.442695
    %v956 = vpow.pop %v955
    %v957 = vmul.f32 %v935, 1.442695
    %v958 = vpow.pop %v957
    %v959 = vmul.f32 %v936, 1.442695
    %v960 = vpow.pop %v959
    %v961 = vmul.f32 %v937, 1.442695
    %v962 = vpow.pop %v961
    %v963 = vmul.f32 %v938, 1.442695
    %v964 = vpow.pop %v963
    %v965 = vmul.f32 %v939, 1.442695
    %v966 = vpow.pop %v965
    %v967 = vmul.f32 %v940, 1.442695
    %v968 = vpow.pop %v967
    %v969 = vmul.f32 %v941, 1.442695
    %v970 = vpow.pop %v969
    %v971 = vmul.f32 %v942, 1.442695
    %v972 = vpow.pop %v971
    %v973 = vmul.f32 %v943, 1.442695
    %v974 = vpow.pop %v973
    %v975 = vmul.f32 %v944, 1.442695
    %v976 = vpow.pop %v975
    %977 = vadd.xlane.f32.xlu0 %v946
    %v978 = vpop.xlane.xlu0 %977
    %979 = vadd.xlane.f32.xlu0 %v948
    %v980 = vpop.xlane.xlu0 %979
    %981 = vadd.xlane.f32.xlu0 %v950
    %v982 = vpop.xlane.xlu0 %981
    %983 = vadd.xlane.f32.xlu0 %v952
    %v984 = vpop.xlane.xlu0 %983
    %985 = vadd.xlane.f32.xlu0 %v954
    %v986 = vpop.xlane.xlu0 %985
    %987 = vadd.xlane.f32.xlu0 %v956
    %v988 = vpop.xlane.xlu0 %987
    %989 = vadd.xlane.f32.xlu0 %v958
    %v990 = vpop.xlane.xlu0 %989
    %991 = vadd.xlane.f32.xlu0 %v960
    %v992 = vpop.xlane.xlu0 %991
    %993 = vadd.xlane.f32.xlu0 %v962
    %v994 = vpop.xlane.xlu0 %993
    %995 = vadd.xlane.f32.xlu0 %v964
    %v996 = vpop.xlane.xlu0 %995
    %997 = vadd.xlane.f32.xlu0 %v966
    %v998 = vpop.xlane.xlu0 %997
    %999 = vadd.xlane.f32.xlu0 %v968
    %v1000 = vpop.xlane.xlu0 %999
    %1001 = vadd.xlane.f32.xlu0 %v970
    %v1002 = vpop.xlane.xlu0 %1001
    %1003 = vadd.xlane.f32.xlu0 %v972
    %v1004 = vpop.xlane.xlu0 %1003
    %1005 = vadd.xlane.f32.xlu0 %v974
    %v1006 = vpop.xlane.xlu0 %1005
    %1007 = vadd.xlane.f32.xlu0 %v976
    %v1008 = vpop.xlane.xlu0 %1007
    %v1009 = vlog2.pop %v978
    %v1010 = vmul.f32 %v1009, 0.6931472
    %v1011 = vlog2.pop %v980
    %v1012 = vmul.f32 %v1011, 0.6931472
    %v1013 = vlog2.pop %v982
    %v1014 = vmul.f32 %v1013, 0.6931472
    %v1015 = vlog2.pop %v984
    %v1016 = vmul.f32 %v1015, 0.6931472
    %v1017 = vlog2.pop %v986
    %v1018 = vmul.f32 %v1017, 0.6931472
    %v1019 = vlog2.pop %v988
    %v1020 = vmul.f32 %v1019, 0.6931472
    %v1021 = vlog2.pop %v990
    %v1022 = vmul.f32 %v1021, 0.6931472
    %v1023 = vlog2.pop %v992
    %v1024 = vmul.f32 %v1023, 0.6931472
    %v1025 = vlog2.pop %v994
    %v1026 = vmul.f32 %v1025, 0.6931472
    %v1027 = vlog2.pop %v996
    %v1028 = vmul.f32 %v1027, 0.6931472
    %v1029 = vlog2.pop %v998
    %v1030 = vmul.f32 %v1029, 0.6931472
    %v1031 = vlog2.pop %v1000
    %v1032 = vmul.f32 %v1031, 0.6931472
    %v1033 = vlog2.pop %v1002
    %v1034 = vmul.f32 %v1033, 0.6931472
    %v1035 = vlog2.pop %v1004
    %v1036 = vmul.f32 %v1035, 0.6931472
    %v1037 = vlog2.pop %v1006
    %v1038 = vmul.f32 %v1037, 0.6931472
    %v1039 = vlog2.pop %v1008
    %v1040 = vmul.f32 %v1039, 0.6931472
    %v1041 = vadd.f32 %v898, %v1010
    %v1042 = vadd.f32 %v900, %v1012
    %v1043 = vadd.f32 %v902, %v1014
    %v1044 = vadd.f32 %v904, %v1016
    %v1045 = vadd.f32 %v906, %v1018
    %v1046 = vadd.f32 %v908, %v1020
    %v1047 = vadd.f32 %v910, %v1022
    %v1048 = vadd.f32 %v912, %v1024
    %v1049 = vadd.f32 %v914, %v1026
    %v1050 = vadd.f32 %v916, %v1028
    %v1051 = vadd.f32 %v918, %v1030
    %v1052 = vadd.f32 %v920, %v1032
    %v1053 = vadd.f32 %v922, %v1034
    %v1054 = vadd.f32 %v924, %v1036
    %v1055 = vadd.f32 %v926, %v1038
    %v1056 = vadd.f32 %v928, %v1040
    %v1057 = vsub.f32 %v850, %v1041
    %v1058 = vsub.f32 %v853, %v1042
    %v1059 = vsub.f32 %v856, %v1043
    %v1060 = vsub.f32 %v859, %v1044
    %v1061 = vsub.f32 %v862, %v1045
    %v1062 = vsub.f32 %v865, %v1046
    %v1063 = vsub.f32 %v868, %v1047
    %v1064 = vsub.f32 %v871, %v1048
    %v1065 = vsub.f32 %v874, %v1049
    %v1066 = vsub.f32 %v877, %v1050
    %v1067 = vsub.f32 %v880, %v1051
    %v1068 = vsub.f32 %v883, %v1052
    %v1069 = vsub.f32 %v886, %v1053
    %v1070 = vsub.f32 %v889, %v1054
    %v1071 = vsub.f32 %v892, %v1055
    %v1072 = vsub.f32 %v895, %v1056
    %1073 = vst [vmem:[#allocation2] sm:$0xff] %v1057
    %1074 = vst [vmem:[#allocation2 + $0x8] sm:$0xff] %v1058
    %1075 = vst [vmem:[#allocation2 + $0x10] sm:$0xff] %v1059
    %1076 = vst [vmem:[#allocation2 + $0x18] sm:$0xff] %v1060
    %1077 = vst [vmem:[#allocation2 + $0x20] sm:$0xff] %v1061
    %1078 = vst [vmem:[#allocation2 + $0x28] sm:$0xff] %v1062
    %1079 = vst [vmem:[#allocation2 + $0x30] sm:$0xff] %v1063
    %1080 = vst [vmem:[#allocation2 + $0x38] sm:$0xff] %v1064
    %1081 = vst [vmem:[#allocation2 + $0x40] sm:$0xff] %v1065
    %1082 = vst [vmem:[#allocation2 + $0x48] sm:$0xff] %v1066
    %1083 = vst [vmem:[#allocation2 + $0x50] sm:$0xff] %v1067
    %1084 = vst [vmem:[#allocation2 + $0x58] sm:$0xff] %v1068
    %1085 = vst [vmem:[#allocation2 + $0x60] sm:$0xff] %v1069
    %1086 = vst [vmem:[#allocation2 + $0x68] sm:$0xff] %v1070
    %1087 = vst [vmem:[#allocation2 + $0x70] sm:$0xff] %v1071
    %1088 = vst [vmem:[#allocation2 + $0x78] sm:$0xff] %v1072
    // Predicated region
    $region26: #{tpu_custom_call.1} parent=1 // pred_check
      _
    $region27: #{tpu_custom_call.1} parent=1 // pred_check_branch
      %1090 = sbr.rel (0) target = $region29
    $region28: #{tpu_custom_call.1} parent=1 // pred_region
      %1092 = vsyncadd [#allocation3], 0
      %s1093 = sshll.u32 [#allocation2], 4
      %s1094 = int_to_ptr.vmem [resolvable:$true] %s1093
      %s1095 = sshll.u32 %s6, 4
      %s1096 = int_to_ptr.hbm [resolvable:$true] %s1095
      %1101 = dma.vmem_to_hbm [thread:$0]  %s1094, 2048, %s1096, [#allocation3], 128, 128, 8
    $region29: #{tpu_custom_call.1} parent=1 // pred_fallthru
      _
    // Predicated region
    $region30: #{tpu_custom_call.1} parent=1 // pred_check
      _
    $region31: #{tpu_custom_call.1} parent=1 // pred_check_branch
      %1103 = sbr.rel (0) target = $region33
    $region32: #{tpu_custom_call.1} parent=1 // pred_region
      %1105 = dma.done [#allocation3], 2048
    $region33: #{tpu_custom_call.1} parent=1 // pred_fallthru
      _
    %1106 = vsyncpa [#allocation3], 1

</llo_original>
